<compile_context>
chip_gen: v5e
topology: v5e:2x2
jax: 0.10.0
libtpu: 0.0.40
codegen_flags: <defaults>
</compile_context>

<pallas_src>
import functools

import jax
import jax.numpy as jnp
from jax.experimental import pallas as pl
from jax.experimental.pallas import tpu as pltpu


# --------------------------------------------------------------------------
# Parameter packing (wrapper-side layout plumbing, outside the kernels).
# --------------------------------------------------------------------------
def _pack_params(wv, bv, wu, bu, ww):
    """Fuse V/U projections and lay out Ww with D on the lane axis."""
    wvu = jnp.concatenate([wv, wu], axis=1)       # (L, 2D)
    bvu = jnp.concatenate([bv, bu], axis=1)       # (1, 2D)
    ww_kd = jnp.transpose(ww, (1, 0))             # (K, D)
    return wvu, bvu, ww_kd


# --------------------------------------------------------------------------
# Single-bag kernel (gridless: whole arrays resident in VMEM, no pipeline).
# --------------------------------------------------------------------------
def _attention_gated_kernel(x_ref, wvu_ref, bvu_ref, ww_ref, bw_ref, out_ref):
    """x_ref: (N, L); wvu_ref: (L, 2D); bvu_ref: (1, 2D); ww_ref: (K, D);
    bw_ref: (1, K); out_ref: (K, N)."""
    D = ww_ref.shape[1]

    x = x_ref[...]                                                    # (N, L)

    # Fused gate projection: one MXU matmul producing (N, 2D); accumulate f32.
    h = jnp.dot(x, wvu_ref[...], preferred_element_type=jnp.float32)  # (N, 2D)
    h = h + bvu_ref[...]

    # Split on the 128-lane boundary (D=128); activations stay f32.
    a_v = jnp.tanh(h[:, :D])                                          # (N, D)
    a_u = jax.nn.sigmoid(h[:, D:])                                    # (N, D)
    gated = a_v * a_u                                                 # (N, D)

    if ww_ref.shape[0] == 1:
        # K == 1: VPU multiply + lane reduction instead of a 1-column matmul.
        scores = jnp.sum(gated * ww_ref[...], axis=-1, keepdims=True)  # (N, 1)
    else:
        # General K fallback: contract over D ((N,D) x (K,D) -> (N,K)).
        scores = jax.lax.dot_general(
            gated, ww_ref[...],
            dimension_numbers=(((1,), (1,)), ((), ())),
            preferred_element_type=jnp.float32)

    scores = scores + bw_ref[...]                                     # (N, K)

    # transpose(A, 1, 0) -> (K, N), softmax over N (dim=1). Exact division
    # (pl.reciprocal(approx=True) previously cost ~2.5e-3 relative error).
    a_t = jnp.transpose(scores, (1, 0))                               # (K, N)
    a_t = a_t - jnp.max(a_t, axis=1, keepdims=True)
    e = jnp.exp(a_t)
    out_ref[...] = (e / jnp.sum(e, axis=1, keepdims=True)).astype(out_ref.dtype)


def attention_gated(x, wv, bv, wu, bu, ww, bw, *, matmul_dtype=jnp.float32):
    """Single bag. x: (N, L). Weights stored transposed vs. nn.Linear
    (Wv/Wu: (L, D), Ww: (D, K)). Returns (K, N) softmax attention (isNorm=True).

    For many bags, prefer attention_gated_batched (amortizes call + weight DMA
    cost and fills the MXU M dimension)."""
    N, L = x.shape
    K = ww.shape[1]
    wvu, bvu, ww_kd = _pack_params(wv, bv, wu, bu, ww)

    vmem = pl.BlockSpec(memory_space=pltpu.MemorySpace.VMEM)
    return pl.pallas_call(
        _attention_gated_kernel,
        out_shape=jax.ShapeDtypeStruct((K, N), jnp.float32),
        in_specs=[vmem, vmem, vmem, vmem, vmem],
        out_specs=vmem,
    )(x.astype(matmul_dtype), wvu.astype(matmul_dtype), bvu, ww_kd, bw)


# --------------------------------------------------------------------------
# Batched (bag-blocked) kernel.
# --------------------------------------------------------------------------
def _batched_kernel(x_ref, wvu_ref, bvu_ref, ww_ref, bw_ref, out_ref,
                    *, n_per_bag):
    """x_ref: (BBLK*N, L); wvu_ref: (L, 2D); bvu_ref: (1, 2D); ww_ref: (K, D);
    bw_ref: (1, K); out_ref: (BBLK, K, N)."""
    K, D = ww_ref.shape
    M = x_ref.shape[0]
    bblk = M // n_per_bag

    x = x_ref[...]                                                    # (M, L)

    # One fused MXU matmul for BBLK bags at once -> (M, 2D), f32 accumulate.
    h = jnp.dot(x, wvu_ref[...], preferred_element_type=jnp.float32)
    h = h + bvu_ref[...]

    # D=128 split is on a lane boundary; activations stay f32 (safe on v5e).
    a_v = jnp.tanh(h[:, :D])
    a_u = jax.nn.sigmoid(h[:, D:])
    gated = a_v * a_u                                                 # (M, D)

    # Split the sublane (row) axis back into (bag, instance): layout-free.
    g3 = gated.reshape(bblk, n_per_bag, D)                            # (B,N,D)

    # K is tiny (default 1): per-k VPU multiply + lane (XLU) reduction avoids
    # a narrow MXU matmul and keeps scores already in (bag, instance) layout.
    for k in range(K):
        wk = ww_ref[k:k + 1, :]                                       # (1, D)
        scores = jnp.sum(g3 * wk, axis=-1)                            # (B, N)
        scores = scores + bw_ref[0:1, k:k + 1]                        # (1,1) bc

        # Per-bag softmax over instances: lane reductions, exact division.
        scores = scores - jnp.max(scores, axis=-1, keepdims=True)
        e = jnp.exp(scores)
        p = e / jnp.sum(e, axis=-1, keepdims=True)                    # (B, N)

        out_ref[:, k:k + 1, :] = jnp.expand_dims(p, 1).astype(out_ref.dtype)


def _choose_bag_block(batch, n_per_bag, target_rows=256):
    """Largest divisor of `batch` such that BBLK*N <= target_rows, keeping
    >= 2 grid steps when batch >= 2 so v7x's two TensorCores both get work.
    target_rows=256 matches the v6e/v7x MXU; use 128 to tune for v5e."""
    cap = max(1, target_rows // max(n_per_bag, 1))
    if batch >= 2:
        cap = min(cap, max(1, batch // 2))
    best = 1
    for d in range(1, min(batch, cap) + 1):
        if batch % d == 0:
            best = d
    return best


def attention_gated_batched(x, wv, bv, wu, bu, ww, bw, *,
                            matmul_dtype=jnp.bfloat16, bag_block=None):
    """Batched bags. x: (B, N, L) -> (B, K, N).

    Consecutive bags are blocked together (BBLK bags per grid step) so each
    step runs one (BBLK*N, L) x (L, 2D) matmul — filling the MXU M dimension
    and amortizing per-step pipeline overhead and weight loads. Weights use
    constant index maps (stay VMEM-resident across steps); the bag-group axis
    is 'parallel' (megacore sharding on v7x). matmul_dtype casts only the
    matmul operands; accumulation and softmax math stay float32."""
    B, N, L = x.shape
    D = wv.shape[1]
    K = ww.shape[1]
    wvu, bvu, ww_kd = _pack_params(wv, bv, wu, bu, ww)

    bblk = bag_block if bag_block is not None else _choose_bag_block(B, N)
    assert B % bblk == 0, (B, bblk)
    G = B // bblk
    M = bblk * N

    # (B, N, L) -> (G, BBLK*N, L): contiguous row-major regrouping (free).
    x_grp = x.reshape(G, M, L).astype(matmul_dtype)

    kernel = functools.partial(_batched_kernel, n_per_bag=N)

    return pl.pallas_call(
        kernel,
        out_shape=jax.ShapeDtypeStruct((B, K, N), jnp.float32),
        grid=(G,),
        in_specs=[
            pl.BlockSpec((None, M, L), lambda g: (g, 0, 0)),    # x group g
            pl.BlockSpec((L, 2 * D), lambda g: (0, 0)),         # Wv|Wu (resident)
            pl.BlockSpec((1, 2 * D), lambda g: (0, 0)),         # bv|bu
            pl.BlockSpec((K, D), lambda g: (0, 0)),             # Ww^T
            pl.BlockSpec((1, K), lambda g: (0, 0)),             # bw
        ],
        out_specs=pl.BlockSpec((bblk, K, N), lambda g: (g, 0, 0)),
        compiler_params=pltpu.CompilerParams(
            dimension_semantics=("parallel",)),
    )(x_grp, wvu.astype(matmul_dtype), bvu, ww_kd, bw)


# --------------------------------------------------------------------------
# Pure-JAX reference matching the torch forward (isNorm=True).
# --------------------------------------------------------------------------
def attention_gated_ref(x, wv, bv, wu, bu, ww, bw):
    a_v = jnp.tanh(x @ wv + bv)
    a_u = jax.nn.sigmoid(x @ wu + bu)
    a = (a_v * a_u) @ ww + bw
    a = a.T
    return jax.nn.softmax(a, axis=1)


if __name__ == "__main__":
    # Shapes consistent with the module defaults: bags of N=16 instances,
    # L=512 features, D=128 hidden, K=1 attention head.
    N, L, D, K = 16, 512, 128, 1
    B = 4

    key = jax.random.PRNGKey(0)
    kx, kxb, kwv, kbv, kwu, kbu, kww, kbw = jax.random.split(key, 8)

    x = jax.random.normal(kx, (N, L), dtype=jnp.float32)
    xb = jax.random.normal(kxb, (B, N, L), dtype=jnp.float32)
    wv = jax.random.normal(kwv, (L, D), dtype=jnp.float32) * (1.0 / jnp.sqrt(L))
    bv = jax.random.normal(kbv, (1, D), dtype=jnp.float32) * 0.01
    wu = jax.random.normal(kwu, (L, D), dtype=jnp.float32) * (1.0 / jnp.sqrt(L))
    bu = jax.random.normal(kbu, (1, D), dtype=jnp.float32) * 0.01
    ww = jax.random.normal(kww, (D, K), dtype=jnp.float32) * (1.0 / jnp.sqrt(D))
    bw = jax.random.normal(kbw, (1, K), dtype=jnp.float32) * 0.01

    ref = attention_gated_ref(x, wv, bv, wu, bu, ww, bw)
    ref_b = jax.vmap(
        attention_gated_ref, in_axes=(0, None, None, None, None, None, None)
    )(xb, wv, bv, wu, bu, ww, bw)

    # 1) Single bag, f32 matmul operands.
    out = jax.block_until_ready(attention_gated(x, wv, bv, wu, bu, ww, bw))
    assert out.shape == (K, N), out.shape
    assert jnp.allclose(out, ref, atol=2e-3, rtol=2e-2), (out, ref)
    assert jnp.allclose(jnp.sum(out, axis=1), 1.0, atol=1e-4)

    # 2) Single bag, bf16 matmul operands (f32 accumulate / softmax).
    out_bf16 = jax.block_until_ready(
        attention_gated(x, wv, bv, wu, bu, ww, bw, matmul_dtype=jnp.bfloat16))
    assert jnp.allclose(out_bf16, ref, atol=2e-2, rtol=2e-1), (out_bf16, ref)
    assert jnp.allclose(jnp.sum(out_bf16, axis=1), 1.0, atol=1e-3)

    # 3) Batched bags, bag-blocked grid, f32 operands (tight check).
    out_b = jax.block_until_ready(
        attention_gated_batched(xb, wv, bv, wu, bu, ww, bw,
                                matmul_dtype=jnp.float32))
    assert out_b.shape == (B, K, N), out_b.shape
    assert jnp.allclose(out_b, ref_b, atol=2e-3, rtol=2e-2), (out_b, ref_b)
    assert jnp.allclose(jnp.sum(out_b, axis=-1), 1.0, atol=1e-4)

    # 4) Batched bags, default bf16 fast path, explicit bag_block=2 (2 steps).
    out_b16 = jax.block_until_ready(
        attention_gated_batched(xb, wv, bv, wu, bu, ww, bw, bag_block=2))
    assert out_b16.shape == (B, K, N), out_b16.shape
    assert jnp.allclose(out_b16, ref_b, atol=2e-2, rtol=2e-1), (out_b16, ref_b)
    assert jnp.allclose(jnp.sum(out_b16, axis=-1), 1.0, atol=1e-3)

    print("KERNEL_OK")
</pallas_src>

<mosaic_0001>
module attributes {stable_mosaic.version = 11 : i64} {
  func.func @_attention_gated_kernel(%arg0: memref<16x512xf32, #tpu.memory_space<vmem>>, %arg1: memref<512x256xf32, #tpu.memory_space<vmem>>, %arg2: memref<1x256xf32, #tpu.memory_space<vmem>>, %arg3: memref<1x128xf32, #tpu.memory_space<vmem>>, %arg4: memref<1x1xf32, #tpu.memory_space<vmem>>, %arg5: memref<1x16xf32, #tpu.memory_space<vmem>>) attributes {dimension_semantics = [], scalar_prefetch = 0 : i64, scratch_operands = 0 : i64, tpu.core_type = #tpu.core_type<tc>} {
    %c0 = arith.constant 0 : index
    %c0_0 = arith.constant 0 : index
    %0 = vector.load %arg0[%c0, %c0_0] : memref<16x512xf32, #tpu.memory_space<vmem>>, vector<16x512xf32>
    %c0_1 = arith.constant 0 : index
    %c0_2 = arith.constant 0 : index
    %1 = vector.load %arg1[%c0_1, %c0_2] : memref<512x256xf32, #tpu.memory_space<vmem>>, vector<512x256xf32>
    %cst = arith.constant dense<0.000000e+00> : vector<16x256xf32>
    %2 = tpu.matmul %0, %1, %cst {dimension_numbers = #tpu.dot_dimension_numbers<[1], [0], [0], [1], [0, 0, 1, 1], [], []>} : vector<16x512xf32>, vector<512x256xf32>, vector<16x256xf32> -> vector<16x256xf32>
    %c0_3 = arith.constant 0 : index
    %c0_4 = arith.constant 0 : index
    %3 = vector.load %arg2[%c0_3, %c0_4] : memref<1x256xf32, #tpu.memory_space<vmem>>, vector<1x256xf32>
    %4 = vector.broadcast %3 : vector<1x256xf32> to vector<16x256xf32>
    %5 = arith.addf %2, %4 : vector<16x256xf32>
    %6 = vector.extract_strided_slice %5 {offsets = [0, 0], sizes = [16, 128], strides = [1, 1]} : vector<16x256xf32> to vector<16x128xf32>
    %7 = math.tanh %6 : vector<16x128xf32>
    %8 = vector.extract_strided_slice %5 {offsets = [0, 128], sizes = [16, 128], strides = [1, 1]} : vector<16x256xf32> to vector<16x128xf32>
    %9 = arith.negf %8 : vector<16x128xf32>
    %10 = math.exp %9 : vector<16x128xf32>
    %cst_5 = arith.constant 1.000000e+00 : f32
    %11 = vector.broadcast %cst_5 : f32 to vector<16x128xf32>
    %12 = arith.addf %11, %10 : vector<16x128xf32>
    %13 = arith.divf %11, %12 : vector<16x128xf32>
    %14 = arith.mulf %7, %13 : vector<16x128xf32>
    %c0_6 = arith.constant 0 : index
    %c0_7 = arith.constant 0 : index
    %15 = vector.load %arg3[%c0_6, %c0_7] : memref<1x128xf32, #tpu.memory_space<vmem>>, vector<1x128xf32>
    %16 = vector.broadcast %15 : vector<1x128xf32> to vector<16x128xf32>
    %17 = arith.mulf %14, %16 : vector<16x128xf32>
    %cst_8 = arith.constant dense<0.000000e+00> : vector<16xf32>
    %18 = vector.multi_reduction <add>, %17, %cst_8 [1] : vector<16x128xf32> to vector<16xf32>
    %19 = vector.shape_cast %18 : vector<16xf32> to vector<16x1xf32>
    %c0_9 = arith.constant 0 : index
    %c0_10 = arith.constant 0 : index
    %20 = vector.load %arg4[%c0_9, %c0_10] : memref<1x1xf32, #tpu.memory_space<vmem>>, vector<1x1xf32>
    %21 = vector.broadcast %20 : vector<1x1xf32> to vector<16x1xf32>
    %22 = arith.addf %19, %21 : vector<16x1xf32>
    %23 = tpu.transpose %22, [1, 0] : vector<16x1xf32> -> vector<1x16xf32>
    %cst_11 = arith.constant dense<0xFF800000> : vector<1xf32>
    %24 = vector.multi_reduction <maximumf>, %23, %cst_11 [1] : vector<1x16xf32> to vector<1xf32>
    %25 = vector.shape_cast %24 : vector<1xf32> to vector<1x1xf32>
    %26 = vector.broadcast %25 : vector<1x1xf32> to vector<1x16xf32>
    %27 = arith.subf %23, %26 : vector<1x16xf32>
    %28 = math.exp %27 : vector<1x16xf32>
    %cst_12 = arith.constant dense<0.000000e+00> : vector<1xf32>
    %29 = vector.multi_reduction <add>, %28, %cst_12 [1] : vector<1x16xf32> to vector<1xf32>
    %30 = vector.shape_cast %29 : vector<1xf32> to vector<1x1xf32>
    %31 = vector.broadcast %30 : vector<1x1xf32> to vector<1x16xf32>
    %32 = arith.divf %28, %31 : vector<1x16xf32>
    %c0_13 = arith.constant 0 : index
    %c0_14 = arith.constant 0 : index
    %33 = vector.load %arg5[%c0_13, %c0_14] : memref<1x16xf32, #tpu.memory_space<vmem>>, vector<1x16xf32>
    tpu.vector_store %arg5[%c0_13, %c0_14], %32 {strides = array<i32>} : memref<1x16xf32, #tpu.memory_space<vmem>>, vector<1x16xf32>,
    return
  }
}

</mosaic_0001>

<llo_original>
// kernel: tpu_custom_call.1
$region0: #{tpu_custom_call.1}
  #allocation0 [shape = 'u32[]', space=smem, size = 0x4, offset = 0x4, fixed_abs, tag = 'smem constant byte address 0x4 - core index']
  #allocation1 [shape = 'u32[72,128]{1,0:T(1,128)}', space=vmem, size = 0x9000, scoped, tag = 'internal scratch']
  #allocation2 [shape = 'f32[1,1]{1,0:T(1,128)S(1)}', space=vmem, size = 0x200, scoped, tag = 'scoped memory for tpu_custom_call.1']
  %s0 = inlined_call_operand.hbm [shape: f32[16,512], index: 0, kind: input, shape index: {}]
  %s1 = inlined_call_operand.hbm [shape: f32[512,256], index: 1, kind: input, shape index: {}]
  %s2 = inlined_call_operand.vmem [shape: f32[1,256], index: 2, kind: input, shape index: {}]
  %s3 = inlined_call_operand.vmem [shape: f32[1,128], index: 3, kind: input, shape index: {}]
  %s4 = inlined_call_operand.<no memory space> [shape: f32[1,1], index: 4, kind: input, shape index: {}]
  %s5 = inlined_call_operand.hbm [shape: f32[1,16], index: 5, kind: output, shape index: {}]
  %s6 = sld [smem:[#allocation0]]
  $region38: #{tpu_custom_call.1} parent=0
    _
  %s8 = ssub.s32 1, %s6
  %s9 = scalar_select 0, %s8, %s6
  %v10 = vstv %s4
  %11 = vst [vmem:[#allocation2] sm:$0x1] %v10
  $region1: #{tpu_custom_call.1} parent=0
    #allocation3 [shape = 'u8[32768]{0}', space=vmem, size = 0x8000, scoped, tag = 'input window, operand 0, single buffered']
    #allocation4 [shape = 's32[1]{0}', space=sflag, size = 0x4, scoped, tag = 'scoped memory for tpu_custom_call.1']
    #allocation5 [shape = 's32[1]{0}', space=sflag, size = 0x4, scoped, tag = 'scoped memory for tpu_custom_call.1']
    #allocation6 [shape = 'u8[524288]{0}', space=vmem, size = 0x80000, scoped, tag = 'input window, operand 1, single buffered']
    #allocation7 [shape = 's32[1]{0}', space=sflag, size = 0x4, scoped, tag = 'scoped memory for tpu_custom_call.1']
    #allocation8 [shape = 'u8[512]{0}', space=vmem, size = 0x400, scoped, tag = 'output window, operand 0, single buffered']
    %12 = vsyncpa [#allocation4], 0
    %13 = vsyncpa [#allocation7], 0
    %14 = vsyncpa [#allocation5], 0
    // Predicated region
    $region2: #{tpu_custom_call.1} parent=1 // pred_check
      _
    $region3: #{tpu_custom_call.1} parent=1 // pred_check_branch
      %16 = sbr.rel (0) target = $region5
    $region4: #{tpu_custom_call.1} parent=1 // pred_region
      %18 = vsyncadd [#allocation4], 0
      %s19 = sshll.u32 %s0, 4
      %s20 = int_to_ptr.hbm [resolvable:$true] %s19
      %s21 = sshll.u32 [#allocation3], 4
      %s22 = int_to_ptr.vmem [resolvable:$true] %s21
      %27 = dma.hbm_to_vmem [thread:$0]  %s20, 1024, %s22, [#allocation4], 512, 512, 32
    $region5: #{tpu_custom_call.1} parent=1 // pred_fallthru
      _
    // Predicated region
    $region6: #{tpu_custom_call.1} parent=1 // pred_check
      _
    $region7: #{tpu_custom_call.1} parent=1 // pred_check_branch
      %29 = sbr.rel (0) target = $region9
    $region8: #{tpu_custom_call.1} parent=1 // pred_region
      %31 = vsyncadd [#allocation7], 0
      %s32 = sshll.u32 %s1, 4
      %s33 = int_to_ptr.hbm [resolvable:$true] %s32
      %s34 = sshll.u32 [#allocation6], 4
      %s35 = int_to_ptr.vmem [resolvable:$true] %s34
      %40 = dma.hbm_to_vmem [thread:$0]  %s33, 16384, %s35, [#allocation7], 256, 256, 16
    $region9: #{tpu_custom_call.1} parent=1 // pred_fallthru
      _
    // Predicated region
    $region10: #{tpu_custom_call.1} parent=1 // pred_check
      _
    $region11: #{tpu_custom_call.1} parent=1 // pred_check_branch
      %42 = sbr.rel (0) target = $region13
    $region12: #{tpu_custom_call.1} parent=1 // pred_region
      _
    $region13: #{tpu_custom_call.1} parent=1 // pred_fallthru
      _
    // Predicated region
    $region14: #{tpu_custom_call.1} parent=1 // pred_check
      _
    $region15: #{tpu_custom_call.1} parent=1 // pred_check_branch
      %44 = sbr.rel (0) target = $region17
    $region16: #{tpu_custom_call.1} parent=1 // pred_region
      _
    $region17: #{tpu_custom_call.1} parent=1 // pred_fallthru
      _
    // Predicated region
    $region18: #{tpu_custom_call.1} parent=1 // pred_check
      _
    $region19: #{tpu_custom_call.1} parent=1 // pred_check_branch
      %46 = sbr.rel (0) target = $region21
    $region20: #{tpu_custom_call.1} parent=1 // pred_region
      _
    $region21: #{tpu_custom_call.1} parent=1 // pred_fallthru
      _
    // Predicated region
    $region22: #{tpu_custom_call.1} parent=1 // pred_check
      _
    $region23: #{tpu_custom_call.1} parent=1 // pred_check_branch
      %48 = sbr.rel (0) target = $region25
    $region24: #{tpu_custom_call.1} parent=1 // pred_region
      %50 = dma.done [#allocation4], 1024
    $region25: #{tpu_custom_call.1} parent=1 // pred_fallthru
      _
    // Predicated region
    $region26: #{tpu_custom_call.1} parent=1 // pred_check
      _
    $region27: #{tpu_custom_call.1} parent=1 // pred_check_branch
      %52 = sbr.rel (0) target = $region29
    $region28: #{tpu_custom_call.1} parent=1 // pred_region
      %54 = dma.done [#allocation7], 16384
    $region29: #{tpu_custom_call.1} parent=1 // pred_fallthru
      _
    %v55 = vld [vmem:[#allocation3] sm:$0xff]
    %v56 = vld [vmem:[#allocation3 + $0x8] sm:$0xff]
    %v57 = vld [vmem:[#allocation3 + $0x10] sm:$0xff]
    %v58 = vld [vmem:[#allocation3 + $0x18] sm:$0xff]
    %v59 = vld [vmem:[#allocation3 + $0x20] sm:$0xff]
    %v60 = vld [vmem:[#allocation3 + $0x28] sm:$0xff]
    %v61 = vld [vmem:[#allocation3 + $0x30] sm:$0xff]
    %v62 = vld [vmem:[#allocation3 + $0x38] sm:$0xff]
    %v63 = vld [vmem:[#allocation6] sm:$0xff]
    %v64 = vld [vmem:[#allocation6 + $0x8] sm:$0xff]
    %v65 = vld [vmem:[#allocation6 + $0x10] sm:$0xff]
    %v66 = vld [vmem:[#allocation6 + $0x18] sm:$0xff]
    %v67 = vld [vmem:[#allocation6 + $0x20] sm:$0xff]
    %v68 = vld [vmem:[#allocation6 + $0x28] sm:$0xff]
    %v69 = vld [vmem:[#allocation6 + $0x30] sm:$0xff]
    %v70 = vld [vmem:[#allocation6 + $0x38] sm:$0xff]
    %v71 = vld [vmem:[#allocation6 + $0x40] sm:$0xff]
    %v72 = vld [vmem:[#allocation6 + $0x48] sm:$0xff]
    %v73 = vld [vmem:[#allocation6 + $0x50] sm:$0xff]
    %v74 = vld [vmem:[#allocation6 + $0x58] sm:$0xff]
    %v75 = vld [vmem:[#allocation6 + $0x60] sm:$0xff]
    %v76 = vld [vmem:[#allocation6 + $0x68] sm:$0xff]
    %v77 = vld [vmem:[#allocation6 + $0x70] sm:$0xff]
    %v78 = vld [vmem:[#allocation6 + $0x78] sm:$0xff]
    %v79 = vld [vmem:[#allocation6 + $0x80] sm:$0xff]
    %v80 = vld [vmem:[#allocation6 + $0x88] sm:$0xff]
    %v81 = vld [vmem:[#allocation6 + $0x90] sm:$0xff]
    %v82 = vld [vmem:[#allocation6 + $0x98] sm:$0xff]
    %v83 = vld [vmem:[#allocation6 + $0xa0] sm:$0xff]
    %v84 = vld [vmem:[#allocation6 + $0xa8] sm:$0xff]
    %v85 = vld [vmem:[#allocation6 + $0xb0] sm:$0xff]
    %v86 = vld [vmem:[#allocation6 + $0xb8] sm:$0xff]
    %v87 = vld [vmem:[#allocation6 + $0xc0] sm:$0xff]
    %v88 = vld [vmem:[#allocation6 + $0xc8] sm:$0xff]
    %v89 = vld [vmem:[#allocation6 + $0xd0] sm:$0xff]
    %v90 = vld [vmem:[#allocation6 + $0xd8] sm:$0xff]
    %v91 = vld [vmem:[#allocation6 + $0xe0] sm:$0xff]
    %v92 = vld [vmem:[#allocation6 + $0xe8] sm:$0xff]
    %v93 = vld [vmem:[#allocation6 + $0xf0] sm:$0xff]
    %v94 = vld [vmem:[#allocation6 + $0xf8] sm:$0xff]
    %v95 = vld [vmem:[#allocation6 + $0x100] sm:$0xff]
    %v96 = vld [vmem:[#allocation6 + $0x108] sm:$0xff]
    %v97 = vld [vmem:[#allocation6 + $0x110] sm:$0xff]
    %v98 = vld [vmem:[#allocation6 + $0x118] sm:$0xff]
    %v99 = vld [vmem:[#allocation6 + $0x120] sm:$0xff]
    %v100 = vld [vmem:[#allocation6 + $0x128] sm:$0xff]
    %v101 = vld [vmem:[#allocation6 + $0x130] sm:$0xff]
    %v102 = vld [vmem:[#allocation6 + $0x138] sm:$0xff]
    %v103 = vld [vmem:[#allocation6 + $0x140] sm:$0xff]
    %v104 = vld [vmem:[#allocation6 + $0x148] sm:$0xff]
    %v105 = vld [vmem:[#allocation6 + $0x150] sm:$0xff]
    %v106 = vld [vmem:[#allocation6 + $0x158] sm:$0xff]
    %v107 = vld [vmem:[#allocation6 + $0x160] sm:$0xff]
    %v108 = vld [vmem:[#allocation6 + $0x168] sm:$0xff]
    %v109 = vld [vmem:[#allocation6 + $0x170] sm:$0xff]
    %v110 = vld [vmem:[#allocation6 + $0x178] sm:$0xff]
    %v111 = vld [vmem:[#allocation6 + $0x180] sm:$0xff]
    %v112 = vld [vmem:[#allocation6 + $0x188] sm:$0xff]
    %v113 = vld [vmem:[#allocation6 + $0x190] sm:$0xff]
    %v114 = vld [vmem:[#allocation6 + $0x198] sm:$0xff]
    %v115 = vld [vmem:[#allocation6 + $0x1a0] sm:$0xff]
    %v116 = vld [vmem:[#allocation6 + $0x1a8] sm:$0xff]
    %v117 = vld [vmem:[#allocation6 + $0x1b0] sm:$0xff]
    %v118 = vld [vmem:[#allocation6 + $0x1b8] sm:$0xff]
    %v119 = vld [vmem:[#allocation6 + $0x1c0] sm:$0xff]
    %v120 = vld [vmem:[#allocation6 + $0x1c8] sm:$0xff]
    %v121 = vld [vmem:[#allocation6 + $0x1d0] sm:$0xff]
    %v122 = vld [vmem:[#allocation6 + $0x1d8] sm:$0xff]
    %v123 = vld [vmem:[#allocation6 + $0x1e0] sm:$0xff]
    %v124 = vld [vmem:[#allocation6 + $0x1e8] sm:$0xff]
    %v125 = vld [vmem:[#allocation6 + $0x1f0] sm:$0xff]
    %v126 = vld [vmem:[#allocation6 + $0x1f8] sm:$0xff]
    %v127 = vld [vmem:[#allocation6 + $0x200] sm:$0xff]
    %v128 = vld [vmem:[#allocation6 + $0x208] sm:$0xff]
    %v129 = vld [vmem:[#allocation6 + $0x210] sm:$0xff]
    %v130 = vld [vmem:[#allocation6 + $0x218] sm:$0xff]
    %v131 = vld [vmem:[#allocation6 + $0x220] sm:$0xff]
    %v132 = vld [vmem:[#allocation6 + $0x228] sm:$0xff]
    %v133 = vld [vmem:[#allocation6 + $0x230] sm:$0xff]
    %v134 = vld [vmem:[#allocation6 + $0x238] sm:$0xff]
    %v135 = vld [vmem:[#allocation6 + $0x240] sm:$0xff]
    %v136 = vld [vmem:[#allocation6 + $0x248] sm:$0xff]
    %v137 = vld [vmem:[#allocation6 + $0x250] sm:$0xff]
    %v138 = vld [vmem:[#allocation6 + $0x258] sm:$0xff]
    %v139 = vld [vmem:[#allocation6 + $0x260] sm:$0xff]
    %v140 = vld [vmem:[#allocation6 + $0x268] sm:$0xff]
    %v141 = vld [vmem:[#allocation6 + $0x270] sm:$0xff]
    %v142 = vld [vmem:[#allocation6 + $0x278] sm:$0xff]
    %v143 = vld [vmem:[#allocation6 + $0x280] sm:$0xff]
    %v144 = vld [vmem:[#allocation6 + $0x288] sm:$0xff]
    %v145 = vld [vmem:[#allocation6 + $0x290] sm:$0xff]
    %v146 = vld [vmem:[#allocation6 + $0x298] sm:$0xff]
    %v147 = vld [vmem:[#allocation6 + $0x2a0] sm:$0xff]
    %v148 = vld [vmem:[#allocation6 + $0x2a8] sm:$0xff]
    %v149 = vld [vmem:[#allocation6 + $0x2b0] sm:$0xff]
    %v150 = vld [vmem:[#allocation6 + $0x2b8] sm:$0xff]
    %v151 = vld [vmem:[#allocation6 + $0x2c0] sm:$0xff]
    %v152 = vld [vmem:[#allocation6 + $0x2c8] sm:$0xff]
    %v153 = vld [vmem:[#allocation6 + $0x2d0] sm:$0xff]
    %v154 = vld [vmem:[#allocation6 + $0x2d8] sm:$0xff]
    %v155 = vld [vmem:[#allocation6 + $0x2e0] sm:$0xff]
    %v156 = vld [vmem:[#allocation6 + $0x2e8] sm:$0xff]
    %v157 = vld [vmem:[#allocation6 + $0x2f0] sm:$0xff]
    %v158 = vld [vmem:[#allocation6 + $0x2f8] sm:$0xff]
    %v159 = vld [vmem:[#allocation6 + $0x300] sm:$0xff]
    %v160 = vld [vmem:[#allocation6 + $0x308] sm:$0xff]
    %v161 = vld [vmem:[#allocation6 + $0x310] sm:$0xff]
    %v162 = vld [vmem:[#allocation6 + $0x318] sm:$0xff]
    %v163 = vld [vmem:[#allocation6 + $0x320] sm:$0xff]
    %v164 = vld [vmem:[#allocation6 + $0x328] sm:$0xff]
    %v165 = vld [vmem:[#allocation6 + $0x330] sm:$0xff]
    %v166 = vld [vmem:[#allocation6 + $0x338] sm:$0xff]
    %v167 = vld [vmem:[#allocation6 + $0x340] sm:$0xff]
    %v168 = vld [vmem:[#allocation6 + $0x348] sm:$0xff]
    %v169 = vld [vmem:[#allocation6 + $0x350] sm:$0xff]
    %v170 = vld [vmem:[#allocation6 + $0x358] sm:$0xff]
    %v171 = vld [vmem:[#allocation6 + $0x360] sm:$0xff]
    %v172 = vld [vmem:[#allocation6 + $0x368] sm:$0xff]
    %v173 = vld [vmem:[#allocation6 + $0x370] sm:$0xff]
    %v174 = vld [vmem:[#allocation6 + $0x378] sm:$0xff]
    %v175 = vld [vmem:[#allocation6 + $0x380] sm:$0xff]
    %v176 = vld [vmem:[#allocation6 + $0x388] sm:$0xff]
    %v177 = vld [vmem:[#allocation6 + $0x390] sm:$0xff]
    %v178 = vld [vmem:[#allocation6 + $0x398] sm:$0xff]
    %v179 = vld [vmem:[#allocation6 + $0x3a0] sm:$0xff]
    %v180 = vld [vmem:[#allocation6 + $0x3a8] sm:$0xff]
    %v181 = vld [vmem:[#allocation6 + $0x3b0] sm:$0xff]
    %v182 = vld [vmem:[#allocation6 + $0x3b8] sm:$0xff]
    %v183 = vld [vmem:[#allocation6 + $0x3c0] sm:$0xff]
    %v184 = vld [vmem:[#allocation6 + $0x3c8] sm:$0xff]
    %v185 = vld [vmem:[#allocation6 + $0x3d0] sm:$0xff]
    %v186 = vld [vmem:[#allocation6 + $0x3d8] sm:$0xff]
    %v187 = vld [vmem:[#allocation6 + $0x3e0] sm:$0xff]
    %v188 = vld [vmem:[#allocation6 + $0x3e8] sm:$0xff]
    %v189 = vld [vmem:[#allocation6 + $0x3f0] sm:$0xff]
    %v190 = vld [vmem:[#allocation6 + $0x3f8] sm:$0xff]
    %v191 = vld [vmem:[%s2] sm:$0x3]
    %v193 = vperm.slane %v191, 0
    %v194 = vperm.slane %v191, 1
    %197 = vmatpush.msra.mxu0 %v93
    %198 = vmatpush.msra.mxu0 %v91
    %199 = vmatpush.msra.mxu0 %v89
    %200 = vmatpush.msra.mxu0 %v87
    %201 = vmatpush.msra.mxu0 %v85
    %202 = vmatpush.msra.mxu0 %v83
    %203 = vmatpush.msra.mxu0 %v81
    %204 = vmatpush.msra.mxu0 %v79
    %205 = vmatpush.msra.mxu0 %v77
    %206 = vmatpush.msra.mxu0 %v75
    %207 = vmatpush.msra.mxu0 %v73
    %208 = vmatpush.msra.mxu0 %v71
    %209 = vmatpush.msra.mxu0 %v69
    %210 = vmatpush.msra.mxu0 %v67
    %211 = vmatpush.msra.mxu0 %v65
    %212 = vmatpush.msra.mxu0 %v63
    %213 = vmatmul.f32.gmra.mxu0 %v55
    %v214 = vpop.f32.mrf.mxu0
    %v215 = vadd.f32 %v193, %v214
    %216 = vmatmul.f32.gmra.mxu0 %v59
    %v217 = vpop.f32.mrf.mxu0
    %v218 = vadd.f32 %v193, %v217
    %219 = vdwg.mxu0
    %220 = vmatpush.msra.mxu0 %v125
    %221 = vmatpush.msra.mxu0 %v123
    %222 = vmatpush.msra.mxu0 %v121
    %223 = vmatpush.msra.mxu0 %v119
    %224 = vmatpush.msra.mxu0 %v117
    %225 = vmatpush.msra.mxu0 %v115
    %226 = vmatpush.msra.mxu0 %v113
    %227 = vmatpush.msra.mxu0 %v111
    %228 = vmatpush.msra.mxu0 %v109
    %229 = vmatpush.msra.mxu0 %v107
    %230 = vmatpush.msra.mxu0 %v105
    %231 = vmatpush.msra.mxu0 %v103
    %232 = vmatpush.msra.mxu0 %v101
    %233 = vmatpush.msra.mxu0 %v99
    %234 = vmatpush.msra.mxu0 %v97
    %235 = vmatpush.msra.mxu0 %v95
    %236 = vmatmul.f32.gmra.mxu0 %v56
    %v237 = vpop.f32.mrf.mxu0
    %v238 = vadd.f32 %v215, %v237
    %239 = vmatmul.f32.gmra.mxu0 %v60
    %v240 = vpop.f32.mrf.mxu0
    %v241 = vadd.f32 %v218, %v240
    %242 = vdwg.mxu0
    %243 = vmatpush.msra.mxu0 %v157
    %244 = vmatpush.msra.mxu0 %v155
    %245 = vmatpush.msra.mxu0 %v153
    %246 = vmatpush.msra.mxu0 %v151
    %247 = vmatpush.msra.mxu0 %v149
    %248 = vmatpush.msra.mxu0 %v147
    %249 = vmatpush.msra.mxu0 %v145
    %250 = vmatpush.msra.mxu0 %v143
    %251 = vmatpush.msra.mxu0 %v141
    %252 = vmatpush.msra.mxu0 %v139
    %253 = vmatpush.msra.mxu0 %v137
    %254 = vmatpush.msra.mxu0 %v135
    %255 = vmatpush.msra.mxu0 %v133
    %256 = vmatpush.msra.mxu0 %v131
    %257 = vmatpush.msra.mxu0 %v129
    %258 = vmatpush.msra.mxu0 %v127
    %259 = vmatmul.f32.gmra.mxu0 %v57
    %v260 = vpop.f32.mrf.mxu0
    %v261 = vadd.f32 %v238, %v260
    %262 = vmatmul.f32.gmra.mxu0 %v61
    %v263 = vpop.f32.mrf.mxu0
    %v264 = vadd.f32 %v241, %v263
    %265 = vdwg.mxu0
    %266 = vmatpush.msra.mxu0 %v189
    %267 = vmatpush.msra.mxu0 %v187
    %268 = vmatpush.msra.mxu0 %v185
    %269 = vmatpush.msra.mxu0 %v183
    %270 = vmatpush.msra.mxu0 %v181
    %271 = vmatpush.msra.mxu0 %v179
    %272 = vmatpush.msra.mxu0 %v177
    %273 = vmatpush.msra.mxu0 %v175
    %274 = vmatpush.msra.mxu0 %v173
    %275 = vmatpush.msra.mxu0 %v171
    %276 = vmatpush.msra.mxu0 %v169
    %277 = vmatpush.msra.mxu0 %v167
    %278 = vmatpush.msra.mxu0 %v165
    %279 = vmatpush.msra.mxu0 %v163
    %280 = vmatpush.msra.mxu0 %v161
    %281 = vmatpush.msra.mxu0 %v159
    %282 = vmatmul.f32.gmra.mxu0 %v58
    %v283 = vpop.f32.mrf.mxu0
    %v284 = vadd.f32 %v261, %v283
    %285 = vmatmul.f32.gmra.mxu0 %v62
    %v286 = vpop.f32.mrf.mxu0
    %v287 = vadd.f32 %v264, %v286
    %288 = vdwg.mxu0
    %289 = vmatpush.msra.mxu0 %v94
    %290 = vmatpush.msra.mxu0 %v92
    %291 = vmatpush.msra.mxu0 %v90
    %292 = vmatpush.msra.mxu0 %v88
    %293 = vmatpush.msra.mxu0 %v86
    %294 = vmatpush.msra.mxu0 %v84
    %295 = vmatpush.msra.mxu0 %v82
    %296 = vmatpush.msra.mxu0 %v80
    %297 = vmatpush.msra.mxu0 %v78
    %298 = vmatpush.msra.mxu0 %v76
    %299 = vmatpush.msra.mxu0 %v74
    %300 = vmatpush.msra.mxu0 %v72
    %301 = vmatpush.msra.mxu0 %v70
    %302 = vmatpush.msra.mxu0 %v68
    %303 = vmatpush.msra.mxu0 %v66
    %304 = vmatpush.msra.mxu0 %v64
    %305 = vmatmul.f32.gmra.mxu0 %v55
    %v306 = vpop.f32.mrf.mxu0
    %v307 = vadd.f32 %v194, %v306
    %308 = vmatmul.f32.gmra.mxu0 %v59
    %v309 = vpop.f32.mrf.mxu0
    %v310 = vadd.f32 %v194, %v309
    %311 = vdwg.mxu0
    %312 = vmatpush.msra.mxu0 %v126
    %313 = vmatpush.msra.mxu0 %v124
    %314 = vmatpush.msra.mxu0 %v122
    %315 = vmatpush.msra.mxu0 %v120
    %316 = vmatpush.msra.mxu0 %v118
    %317 = vmatpush.msra.mxu0 %v116
    %318 = vmatpush.msra.mxu0 %v114
    %319 = vmatpush.msra.mxu0 %v112
    %320 = vmatpush.msra.mxu0 %v110
    %321 = vmatpush.msra.mxu0 %v108
    %322 = vmatpush.msra.mxu0 %v106
    %323 = vmatpush.msra.mxu0 %v104
    %324 = vmatpush.msra.mxu0 %v102
    %325 = vmatpush.msra.mxu0 %v100
    %326 = vmatpush.msra.mxu0 %v98
    %327 = vmatpush.msra.mxu0 %v96
    %328 = vmatmul.f32.gmra.mxu0 %v56
    %v329 = vpop.f32.mrf.mxu0
    %v330 = vadd.f32 %v307, %v329
    %331 = vmatmul.f32.gmra.mxu0 %v60
    %v332 = vpop.f32.mrf.mxu0
    %v333 = vadd.f32 %v310, %v332
    %334 = vdwg.mxu0
    %335 = vmatpush.msra.mxu0 %v158
    %336 = vmatpush.msra.mxu0 %v156
    %337 = vmatpush.msra.mxu0 %v154
    %338 = vmatpush.msra.mxu0 %v152
    %339 = vmatpush.msra.mxu0 %v150
    %340 = vmatpush.msra.mxu0 %v148
    %341 = vmatpush.msra.mxu0 %v146
    %342 = vmatpush.msra.mxu0 %v144
    %343 = vmatpush.msra.mxu0 %v142
    %344 = vmatpush.msra.mxu0 %v140
    %345 = vmatpush.msra.mxu0 %v138
    %346 = vmatpush.msra.mxu0 %v136
    %347 = vmatpush.msra.mxu0 %v134
    %348 = vmatpush.msra.mxu0 %v132
    %349 = vmatpush.msra.mxu0 %v130
    %350 = vmatpush.msra.mxu0 %v128
    %351 = vmatmul.f32.gmra.mxu0 %v57
    %v352 = vpop.f32.mrf.mxu0
    %v353 = vadd.f32 %v330, %v352
    %354 = vmatmul.f32.gmra.mxu0 %v61
    %v355 = vpop.f32.mrf.mxu0
    %v356 = vadd.f32 %v333, %v355
    %357 = vdwg.mxu0
    %358 = vmatpush.msra.mxu0 %v190
    %359 = vmatpush.msra.mxu0 %v188
    %360 = vmatpush.msra.mxu0 %v186
    %361 = vmatpush.msra.mxu0 %v184
    %362 = vmatpush.msra.mxu0 %v182
    %363 = vmatpush.msra.mxu0 %v180
    %364 = vmatpush.msra.mxu0 %v178
    %365 = vmatpush.msra.mxu0 %v176
    %366 = vmatpush.msra.mxu0 %v174
    %367 = vmatpush.msra.mxu0 %v172
    %368 = vmatpush.msra.mxu0 %v170
    %369 = vmatpush.msra.mxu0 %v168
    %370 = vmatpush.msra.mxu0 %v166
    %371 = vmatpush.msra.mxu0 %v164
    %372 = vmatpush.msra.mxu0 %v162
    %373 = vmatpush.msra.mxu0 %v160
    %374 = vmatmul.f32.gmra.mxu0 %v58
    %v375 = vpop.f32.mrf.mxu0
    %v376 = vadd.f32 %v353, %v375
    %377 = vmatmul.f32.gmra.mxu0 %v62
    %v378 = vpop.f32.mrf.mxu0
    %v379 = vadd.f32 %v356, %v378
    %380 = vdwg.mxu0
    %v381 = vtanh.pop %v284
    %v382 = vtanh.pop %v287
    %v383 = vxor.u32 %v376, 2147483648
    %v384 = vxor.u32 %v379, 2147483648
    %v385 = vmul.f32 %v383, 1.442695
    %v386 = vpow.pop %v385
    %v387 = vmul.f32 %v384, 1.442695
    %v388 = vpow.pop %v387
    %v389 = vadd.f32 %v386, 1.0
    %v390 = vadd.f32 %v388, 1.0
    %v391 = vrcp.pop %v389
    %v392 = vmul.f32 %v389, %v391
    %v393 = vsub.f32 1.0, %v392
    %v394 = vmul.f32 %v391, %v393
    %v395 = vadd.f32 %v391, %v394
    %vm396 = vweird.f32 %v389
    %vm397 = vweird.f32 %v391
    %vm398 = vmor %vm396, %vm397
    %v399 = vsel %vm398, %v391, %v395
    %v400 = vand.u32 2147483647, %v389
    %vm401 = vcmp.eq.f32.partialorder %v400, 8.507059e+37
    %v402 = vand.u32 %v389, 2147483648
    %v403 = vor.u32 1.1754944e-38, %v402
    %v404 = vsel %vm401, %v403, %v399
    %v405 = vmul.f32 1.0, %v404
    %v406 = vrcp.pop %v390
    %v407 = vmul.f32 %v390, %v406
    %v408 = vsub.f32 1.0, %v407
    %v409 = vmul.f32 %v406, %v408
    %v410 = vadd.f32 %v406, %v409
    %vm411 = vweird.f32 %v390
    %vm412 = vweird.f32 %v406
    %vm413 = vmor %vm411, %vm412
    %v414 = vsel %vm413, %v406, %v410
    %v415 = vand.u32 2147483647, %v390
    %vm416 = vcmp.eq.f32.partialorder %v415, 8.507059e+37
    %v417 = vand.u32 %v390, 2147483648
    %v418 = vor.u32 1.1754944e-38, %v417
    %v419 = vsel %vm416, %v418, %v414
    %v420 = vmul.f32 1.0, %v419
    %v421 = vmul.f32 %v381, %v405
    %v422 = vmul.f32 %v382, %v420
    %v423 = vld [vmem:[%s3] sm:$0x1]
    %v425 = vperm.slane %v423, 0
    %v427 = vmul.f32 %v421, %v425
    %v428 = vmul.f32 %v422, %v425
    %429 = vadd.xlane.f32.xlu0 %v427
    %v430 = vpop.xlane.xlu0 %429
    %431 = vadd.xlane.f32.xlu0 %v428
    %v432 = vpop.xlane.xlu0 %431
    %v433 = vld [vmem:[#allocation2] sm:$0x1]
    %v435 = vperm.slane %v433, 0
    %v437 = vadd.f32 %v430, %v435
    %v438 = vadd.f32 %v432, %v435
    %439 = vxpose.xlu0.b32.start [1/16] %v437, 128
    %440 = vxpose.xlu0.b32.cont [2/16] %v438, 128
    %441 = vxpose.xlu0.b32.cont [3/16] 0.0, 128
    %442 = vxpose.xlu0.b32.cont [4/16] 0.0, 128
    %443 = vxpose.xlu0.b32.cont [5/16] 0.0, 128
    %444 = vxpose.xlu0.b32.cont [6/16] 0.0, 128
    %445 = vxpose.xlu0.b32.cont [7/16] 0.0, 128
    %446 = vxpose.xlu0.b32.cont [8/16] 0.0, 128
    %447 = vxpose.xlu0.b32.cont [9/16] 0.0, 128
    %448 = vxpose.xlu0.b32.cont [10/16] 0.0, 128
    %449 = vxpose.xlu0.b32.cont [11/16] 0.0, 128
    %450 = vxpose.xlu0.b32.cont [12/16] 0.0, 128
    %451 = vxpose.xlu0.b32.cont [13/16] 0.0, 128
    %452 = vxpose.xlu0.b32.cont [14/16] 0.0, 128
    %453 = vxpose.xlu0.b32.cont [15/16] 0.0, 128
    %454 = vxpose.xlu0.b32.end [16/16] 0.0, 128
    %v455 = vpop.trf.xlu0
    %v456 = vpop.trf.xlu0
    %v457 = vpop.trf.xlu0
    %v458 = vpop.trf.xlu0
    %v459 = vpop.trf.xlu0
    %v460 = vpop.trf.xlu0
    %v461 = vpop.trf.xlu0
    %v462 = vpop.trf.xlu0
    %v463 = vpop.trf.xlu0
    %v464 = vpop.trf.xlu0
    %v465 = vpop.trf.xlu0
    %v466 = vpop.trf.xlu0
    %v467 = vpop.trf.xlu0
    %v468 = vpop.trf.xlu0
    %v469 = vpop.trf.xlu0
    %v470 = vpop.trf.xlu0
    %vm471 = vcmask 122880
    %v472 = vsel %vm471, %v455, -inf
    %473 = vmax.xlane.f32.xlu0 %v472
    %v474 = vpop.xlane.xlu0 %473
    %v475 = vsub.f32 %v455, %v474
    %v476 = vmul.f32 %v475, 1.442695
    %v477 = vpow.pop %v476
    %v478 = vsel %vm471, %v477, 0.0
    %479 = vadd.xlane.f32.xlu0 %v478
    %v480 = vpop.xlane.xlu0 %479
    %v481 = vrcp.pop %v480
    %v482 = vmul.f32 %v480, %v481
    %v483 = vsub.f32 1.0, %v482
    %v484 = vmul.f32 %v481, %v483
    %v485 = vadd.f32 %v481, %v484
    %vm486 = vweird.f32 %v480
    %vm487 = vweird.f32 %v481
    %vm488 = vmor %vm486, %vm487
    %v489 = vsel %vm488, %v481, %v485
    %v490 = vand.u32 2147483647, %v480
    %vm491 = vcmp.eq.f32.partialorder %v490, 8.507059e+37
    %v492 = vand.u32 %v480, 2147483648
    %v493 = vor.u32 1.1754944e-38, %v492
    %v494 = vsel %vm491, %v493, %v489
    %v495 = vmul.f32 %v477, %v494
    %496 = vst.msk [vmem:[#allocation8] sm:$0x1] %vm471, %v495
    // Predicated region
    $region30: #{tpu_custom_call.1} parent=1 // pred_check
      _
    $region31: #{tpu_custom_call.1} parent=1 // pred_check_branch
      %498 = sbr.rel (0) target = $region33
    $region32: #{tpu_custom_call.1} parent=1 // pred_region
      %500 = vsyncadd [#allocation5], 0
      %s502 = sshll.u32 [#allocation8], 4
      %s503 = int_to_ptr.vmem [resolvable:$true] %s502
      %s504 = sshll.u32 %s5, 4
      %s505 = int_to_ptr.hbm [resolvable:$true] %s504
      %507 = dma.vmem_to_hbm [thread:$0]  %s503, 16, %s505, [#allocation5]
    $region33: #{tpu_custom_call.1} parent=1 // pred_fallthru
      _
    // Predicated region
    $region34: #{tpu_custom_call.1} parent=1 // pred_check
      _
    $region35: #{tpu_custom_call.1} parent=1 // pred_check_branch
      %509 = sbr.rel (0) target = $region37
    $region36: #{tpu_custom_call.1} parent=1 // pred_region
      %511 = dma.done [#allocation5], 16
    $region37: #{tpu_custom_call.1} parent=1 // pred_fallthru
      _
    %512 = vsyncpa [#allocation4], 1
    %513 = vsyncpa [#allocation7], 1
    %514 = vsyncpa [#allocation5], 1

</llo_original>
